<compile_context>
chip_gen: v7x
topology: tpu7x:2x2x1
jax: 0.10.0
libtpu: 0.0.40
codegen_flags: <defaults>
</compile_context>

<pallas_src>
import functools

import jax
import jax.numpy as jnp
from jax.experimental import pallas as pl
from jax.experimental.pallas import tpu as pltpu

NUM_CLASSES = 4


def _choose_tile_h(h, w, itemsize, target_bytes=1 << 20):
    """Largest H-chunk (multiple of 8, or the full H) within ~target_bytes."""
    rows = max(1, target_bytes // max(1, w * itemsize))
    if rows >= h:
        return h
    rows = max(8, (rows // 8) * 8)
    return h if rows >= h else rows


def _dice_loss_kernel(yt_ref, yp_ref, out_ref, acc_prod, acc_sum, dice_acc,
                      *, smooth, num_classes, inv_num_classes, h_total,
                      tile_h, need_mask):
    # yt_ref / yp_ref: (TILE_H, W) tiles of one (batch, class) plane in VMEM.
    # out_ref: (1, 1) f32 in SMEM.  acc_*: (TILE_H, W) f32 VMEM accumulators.
    # dice_acc: (1,) f32 SMEM running sum of per-class dice coefficients.
    c = pl.program_id(0)
    b = pl.program_id(1)
    h = pl.program_id(2)
    nb = pl.num_programs(1)
    nh = pl.num_programs(2)

    first_of_class = jnp.logical_and(b == 0, h == 0)
    last_of_class = jnp.logical_and(b == nb - 1, h == nh - 1)

    @pl.when(jnp.logical_and(c == 0, first_of_class))
    def _():
        dice_acc[0] = 0.0

    @pl.when(first_of_class)
    def _():
        acc_prod[...] = jnp.zeros_like(acc_prod)
        acc_sum[...] = jnp.zeros_like(acc_sum)

    # Upcast per tile (inputs may be bf16); keep HBM traffic at native width.
    yt = yt_ref[...].astype(jnp.float32)
    yp = yp_ref[...].astype(jnp.float32)

    if need_mask:
        # Last partial H-chunk contains undefined padding rows -> zero them.
        row = jax.lax.broadcasted_iota(jnp.int32, (tile_h, 1), 0)
        valid = (h * tile_h + row) < h_total
        yt = jnp.where(valid, yt, 0.0)
        yp = jnp.where(valid, yp, 0.0)

    # Steady state: pure VPU elementwise accumulation (no XLU, no SMEM writes).
    acc_prod[...] += yt * yp
    acc_sum[...] += yt + yp

    @pl.when(last_of_class)
    def _():
        # Per-class finalize: cross-lane reduce + dice combine, once per class.
        intersection = jnp.sum(acc_prod[...])
        denom = jnp.sum(acc_sum[...]) + smooth
        dice_acc[0] += (2.0 * intersection + smooth) / denom

    @pl.when(jnp.logical_and(c == num_classes - 1, last_of_class))
    def _():
        out_ref[0, 0] = 1.0 - dice_acc[0] * inv_num_classes


def dice_loss(y_true, y_pred, smooth=1.0, num_classes=NUM_CLASSES):
    """Pallas equivalent of DiceLoss(smooth).forward(y_true, y_pred)."""
    assert y_true.shape == y_pred.shape
    B, C, H, W = y_true.shape
    assert C >= num_classes

    itemsize = max(jnp.dtype(y_true.dtype).itemsize,
                   jnp.dtype(y_pred.dtype).itemsize)
    tile_h = _choose_tile_h(H, W, itemsize)
    n_h = pl.cdiv(H, tile_h)
    need_mask = (H % tile_h) != 0

    kernel = functools.partial(
        _dice_loss_kernel,
        smooth=float(smooth),
        num_classes=int(num_classes),
        inv_num_classes=1.0 / float(num_classes),
        h_total=H,
        tile_h=tile_h,
        need_mask=need_mask)

    # One (TILE_H, W) tile per (class, batch, h-chunk) grid point, taken
    # straight out of the NCHW array (no wrapper-side data movement at all).
    in_spec = pl.BlockSpec((None, None, tile_h, W),
                           lambda c, b, h: (b, c, h, 0))

    out = pl.pallas_call(
        kernel,
        out_shape=jax.ShapeDtypeStruct((1, 1), jnp.float32),
        grid=(num_classes, B, n_h),
        in_specs=[in_spec, in_spec],
        out_specs=pl.BlockSpec(memory_space=pltpu.MemorySpace.SMEM),
        scratch_shapes=[
            pltpu.VMEM((tile_h, W), jnp.float32),   # sum(yt * yp) accumulator
            pltpu.VMEM((tile_h, W), jnp.float32),   # sum(yt + yp) accumulator
            pltpu.SMEM((1,), jnp.float32),          # running dice sum
        ],
        compiler_params=pltpu.CompilerParams(
            dimension_semantics=("arbitrary", "arbitrary", "arbitrary")),
    )(y_true, y_pred)
    return out[0, 0]


def _dice_loss_ref(y_true, y_pred, smooth=1.0, num_classes=NUM_CLASSES):
    # Pure-JAX reference mirroring the PyTorch loop for verification.
    total = 0.0
    for i in range(num_classes):
        t = y_true[:, i, :, :].astype(jnp.float32)
        p = y_pred[:, i, :, :].astype(jnp.float32)
        inter = jnp.sum(t * p)
        total += (2.0 * inter + smooth) / (jnp.sum(t) + jnp.sum(p) + smooth)
    return 1.0 - total / num_classes


if __name__ == "__main__":
    key = jax.random.PRNGKey(0)
    k1, k2 = jax.random.split(key)

    B, C, H, W = 2, 4, 16, 16
    # y_true: one-hot-ish masks, y_pred: probabilities in [0, 1].
    y_true = (jax.random.uniform(k1, (B, C, H, W)) > 0.5).astype(jnp.float32)
    y_pred = jax.random.uniform(k2, (B, C, H, W), dtype=jnp.float32)

    loss = jax.block_until_ready(dice_loss(y_true, y_pred, smooth=1.0))
    ref = jax.block_until_ready(_dice_loss_ref(y_true, y_pred, smooth=1.0))

    assert jnp.allclose(loss, ref, atol=1e-5, rtol=1e-5), (loss, ref)
    print("KERNEL_OK")
</pallas_src>

<mosaic_0001>
module attributes {stable_mosaic.version = 11 : i64} {
  func.func @_dice_loss_kernel(%arg0: i32, %arg1: i32, %arg2: i32, %arg3: memref<1x1x16x16xf32, #tpu.memory_space<vmem>>, %arg4: memref<1x1x16x16xf32, #tpu.memory_space<vmem>>, %arg5: memref<1x1xf32, #tpu.memory_space<smem>>, %arg6: memref<16x16xf32, #tpu.memory_space<vmem>>, %arg7: memref<16x16xf32, #tpu.memory_space<vmem>>, %arg8: memref<1xf32, #tpu.memory_space<smem>>) attributes {dimension_semantics = [#tpu.dimension_semantics<arbitrary>, #tpu.dimension_semantics<arbitrary>, #tpu.dimension_semantics<arbitrary>], iteration_bounds = array<i64: 4, 2, 1>, scalar_prefetch = 0 : i64, scratch_operands = 3 : i64, tpu.core_type = #tpu.core_type<tc>, window_params = [{transform_indices = @transform_0, window_bounds = array<i64: 1, 1, 16, 16>}, {transform_indices = @transform_1, window_bounds = array<i64: 1, 1, 16, 16>}, {transform_indices = @transform_2, window_bounds = array<i64: 1, 1>}]} {
    %c0_i32 = arith.constant 0 : i32
    %0 = arith.cmpi eq, %arg1, %c0_i32 : i32
    %c0_i32_0 = arith.constant 0 : i32
    %1 = arith.cmpi eq, %arg2, %c0_i32_0 : i32
    %2 = arith.andi %0, %1 : i1
    %c1_i32 = arith.constant 1 : i32
    %3 = arith.cmpi eq, %arg1, %c1_i32 : i32
    %c0_i32_1 = arith.constant 0 : i32
    %4 = arith.cmpi eq, %arg2, %c0_i32_1 : i32
    %5 = arith.andi %3, %4 : i1
    %c0_i32_2 = arith.constant 0 : i32
    %6 = arith.cmpi eq, %arg0, %c0_i32_2 : i32
    %7 = arith.andi %6, %2 : i1
    %8 = arith.extui %7 : i1 to i32
    %c0_i32_3 = arith.constant 0 : i32
    %9 = arith.cmpi ne, %8, %c0_i32_3 : i32
    scf.if %9 {
      %cst = arith.constant 0.000000e+00 : f32
      %c0_22 = arith.constant 0 : index
      %30 = memref.load %arg8[%c0_22] : memref<1xf32, #tpu.memory_space<smem>>
      memref.store %cst, %arg8[%c0_22] : memref<1xf32, #tpu.memory_space<smem>>
    } else {
    }
    %10 = arith.extui %2 : i1 to i32
    %c0_i32_4 = arith.constant 0 : i32
    %11 = arith.cmpi ne, %10, %c0_i32_4 : i32
    scf.if %11 {
      %cst = arith.constant 0.000000e+00 : f32
      %30 = vector.broadcast %cst : f32 to vector<16x16xf32>
      %c0_22 = arith.constant 0 : index
      %c0_23 = arith.constant 0 : index
      %31 = vector.load %arg6[%c0_22, %c0_23] : memref<16x16xf32, #tpu.memory_space<vmem>>, vector<16x16xf32>
      tpu.vector_store %arg6[%c0_22, %c0_23], %30 {strides = array<i32>} : memref<16x16xf32, #tpu.memory_space<vmem>>, vector<16x16xf32>,
      %cst_24 = arith.constant 0.000000e+00 : f32
      %32 = vector.broadcast %cst_24 : f32 to vector<16x16xf32>
      %c0_25 = arith.constant 0 : index
      %c0_26 = arith.constant 0 : index
      %33 = vector.load %arg7[%c0_25, %c0_26] : memref<16x16xf32, #tpu.memory_space<vmem>>, vector<16x16xf32>
      tpu.vector_store %arg7[%c0_25, %c0_26], %32 {strides = array<i32>} : memref<16x16xf32, #tpu.memory_space<vmem>>, vector<16x16xf32>,
    } else {
    }
    %c0 = arith.constant 0 : index
    %c0_5 = arith.constant 0 : index
    %c0_6 = arith.constant 0 : index
    %c0_7 = arith.constant 0 : index
    %12 = vector.load %arg3[%c0, %c0_5, %c0_6, %c0_7] : memref<1x1x16x16xf32, #tpu.memory_space<vmem>>, vector<1x1x16x16xf32>
    %13 = vector.shape_cast %12 : vector<1x1x16x16xf32> to vector<16x16xf32>
    %c0_8 = arith.constant 0 : index
    %c0_9 = arith.constant 0 : index
    %c0_10 = arith.constant 0 : index
    %c0_11 = arith.constant 0 : index
    %14 = vector.load %arg4[%c0_8, %c0_9, %c0_10, %c0_11] : memref<1x1x16x16xf32, #tpu.memory_space<vmem>>, vector<1x1x16x16xf32>
    %15 = vector.shape_cast %14 : vector<1x1x16x16xf32> to vector<16x16xf32>
    %c0_12 = arith.constant 0 : index
    %c0_13 = arith.constant 0 : index
    %16 = vector.load %arg6[%c0_12, %c0_13] : memref<16x16xf32, #tpu.memory_space<vmem>>, vector<16x16xf32>
    %17 = arith.mulf %13, %15 : vector<16x16xf32>
    %18 = arith.addf %16, %17 : vector<16x16xf32>
    %c0_14 = arith.constant 0 : index
    %c0_15 = arith.constant 0 : index
    %19 = vector.load %arg6[%c0_14, %c0_15] : memref<16x16xf32, #tpu.memory_space<vmem>>, vector<16x16xf32>
    tpu.vector_store %arg6[%c0_14, %c0_15], %18 {strides = array<i32>} : memref<16x16xf32, #tpu.memory_space<vmem>>, vector<16x16xf32>,
    %c0_16 = arith.constant 0 : index
    %c0_17 = arith.constant 0 : index
    %20 = vector.load %arg7[%c0_16, %c0_17] : memref<16x16xf32, #tpu.memory_space<vmem>>, vector<16x16xf32>
    %21 = arith.addf %13, %15 : vector<16x16xf32>
    %22 = arith.addf %20, %21 : vector<16x16xf32>
    %c0_18 = arith.constant 0 : index
    %c0_19 = arith.constant 0 : index
    %23 = vector.load %arg7[%c0_18, %c0_19] : memref<16x16xf32, #tpu.memory_space<vmem>>, vector<16x16xf32>
    tpu.vector_store %arg7[%c0_18, %c0_19], %22 {strides = array<i32>} : memref<16x16xf32, #tpu.memory_space<vmem>>, vector<16x16xf32>,
    %24 = arith.extui %5 : i1 to i32
    %c0_i32_20 = arith.constant 0 : i32
    %25 = arith.cmpi ne, %24, %c0_i32_20 : i32
    scf.if %25 {
      %c0_22 = arith.constant 0 : index
      %c0_23 = arith.constant 0 : index
      %30 = vector.load %arg6[%c0_22, %c0_23] : memref<16x16xf32, #tpu.memory_space<vmem>>, vector<16x16xf32>
      %31 = vector.shape_cast %30 : vector<16x16xf32> to vector<1x16x16xf32>
      %cst = arith.constant dense<0.000000e+00> : vector<1xf32>
      %32 = vector.multi_reduction <add>, %31, %cst [1, 2] : vector<1x16x16xf32> to vector<1xf32>
      %33 = vector.shape_cast %32 : vector<1xf32> to vector<1x1x1xf32>
      %34 = vector.extract %33[0, 0, 0] : f32 from vector<1x1x1xf32>
      %c0_24 = arith.constant 0 : index
      %c0_25 = arith.constant 0 : index
      %35 = vector.load %arg7[%c0_24, %c0_25] : memref<16x16xf32, #tpu.memory_space<vmem>>, vector<16x16xf32>
      %36 = vector.shape_cast %35 : vector<16x16xf32> to vector<1x16x16xf32>
      %cst_26 = arith.constant dense<0.000000e+00> : vector<1xf32>
      %37 = vector.multi_reduction <add>, %36, %cst_26 [1, 2] : vector<1x16x16xf32> to vector<1xf32>
      %38 = vector.shape_cast %37 : vector<1xf32> to vector<1x1x1xf32>
      %39 = vector.extract %38[0, 0, 0] : f32 from vector<1x1x1xf32>
      %cst_27 = arith.constant 1.000000e+00 : f32
      %40 = arith.addf %39, %cst_27 : f32
      %c0_28 = arith.constant 0 : index
      %41 = memref.load %arg8[%c0_28] : memref<1xf32, #tpu.memory_space<smem>>
      %cst_29 = arith.constant 2.000000e+00 : f32
      %42 = arith.mulf %cst_29, %34 : f32
      %cst_30 = arith.constant 1.000000e+00 : f32
      %43 = arith.addf %42, %cst_30 : f32
      %44 = arith.divf %43, %40 : f32
      %45 = arith.addf %41, %44 : f32
      %c0_31 = arith.constant 0 : index
      %46 = memref.load %arg8[%c0_31] : memref<1xf32, #tpu.memory_space<smem>>
      memref.store %45, %arg8[%c0_31] : memref<1xf32, #tpu.memory_space<smem>>
    } else {
    }
    %c3_i32 = arith.constant 3 : i32
    %26 = arith.cmpi eq, %arg0, %c3_i32 : i32
    %27 = arith.andi %26, %5 : i1
    %28 = arith.extui %27 : i1 to i32
    %c0_i32_21 = arith.constant 0 : i32
    %29 = arith.cmpi ne, %28, %c0_i32_21 : i32
    scf.if %29 {
      %c0_22 = arith.constant 0 : index
      %30 = memref.load %arg8[%c0_22] : memref<1xf32, #tpu.memory_space<smem>>
      %cst = arith.constant 2.500000e-01 : f32
      %31 = arith.mulf %30, %cst : f32
      %cst_23 = arith.constant 1.000000e+00 : f32
      %32 = arith.subf %cst_23, %31 : f32
      %c0_24 = arith.constant 0 : index
      %c0_25 = arith.constant 0 : index
      %33 = memref.load %arg5[%c0_24, %c0_25] : memref<1x1xf32, #tpu.memory_space<smem>>
      memref.store %32, %arg5[%c0_24, %c0_25] : memref<1x1xf32, #tpu.memory_space<smem>>
    } else {
    }
    return
  }
  func.func @transform_0(%arg0: i32, %arg1: i32, %arg2: i32) -> (i32, i32, i32, i32) {
    %c0_i32 = arith.constant 0 : i32
    %c0_i32_0 = arith.constant 0 : i32
    return %arg1, %arg0, %arg2, %c0_i32 : i32, i32, i32, i32
  }
  func.func @transform_1(%arg0: i32, %arg1: i32, %arg2: i32) -> (i32, i32, i32, i32) {
    %c0_i32 = arith.constant 0 : i32
    %c0_i32_0 = arith.constant 0 : i32
    return %arg1, %arg0, %arg2, %c0_i32 : i32, i32, i32, i32
  }
  func.func @transform_2(%arg0: i32, %arg1: i32, %arg2: i32) -> (i32, i32) {
    %c0_i32 = arith.constant 0 : i32
    %c0_i32_0 = arith.constant 0 : i32
    %c0_i32_1 = arith.constant 0 : i32
    return %c0_i32, %c0_i32_0 : i32, i32
  }
}

</mosaic_0001>

<llo_original>
// kernel: tpu_custom_call.1
$region0: #{tpu_custom_call.1}
  #allocation0 [shape = 'u32[]', space=smem, size = 0x4, offset = 0x4, fixed_abs, tag = 'smem constant byte address 0x4 - core index']
  #allocation1 [shape = 'u32[144,128]{1,0:T(1,128)}', space=vmem, size = 0x12000, scoped, tag = 'internal scratch']
  #allocation2 [shape = 'f32[16,16]{1,0:T(8,128)}', space=vmem, size = 0x2000, scoped, tag = 'scratch operand']
  #allocation3 [shape = 'f32[16,16]{1,0:T(8,128)}', space=vmem, size = 0x2000, scoped, tag = 'scratch operand']
  #allocation4 [shape = 'f32[1]{0:T(128)}', space=smem, size = 0x200, scoped, tag = 'scratch operand']
  %s0 = inlined_call_operand.hbm [shape: f32[2,4,16,16], index: 0, kind: input, shape index: {}]
  %s1 = inlined_call_operand.hbm [shape: f32[2,4,16,16], index: 1, kind: input, shape index: {}]
  %s2 = inlined_call_operand.hbm [shape: f32[1,1], index: 2, kind: output, shape index: {}]
  %s3 = sld [smem:[#allocation0]]
  $region65: #{tpu_custom_call.1} parent=0
    _
  %s5 = ssub.s32 1, %s3
  %s6 = scalar_select 0, %s5, %s3
  $region1: #{tpu_custom_call.1} parent=0
    #allocation5 [shape = 'u8[16384]{0}', space=vmem, size = 0x4000, scoped, tag = 'input window, operand 0']
    #allocation6 [shape = 's32[2]{0}', space=sflag, size = 0x8, scoped, tag = 'scoped memory for tpu_custom_call.1']
    #allocation7 [shape = 's32[2]{0}', space=sflag, size = 0x8, scoped, tag = 'scoped memory for tpu_custom_call.1']
    #allocation8 [shape = 'u8[16384]{0}', space=vmem, size = 0x4000, scoped, tag = 'input window, operand 1']
    #allocation9 [shape = 's32[2]{0}', space=sflag, size = 0x8, scoped, tag = 'scoped memory for tpu_custom_call.1']
    #allocation10 [shape = 'u8[512]{0}', space=smem, size = 0x200, scoped, tag = 'output window, operand 0, single buffered']
    %7 = vsyncpa [#allocation6], 0
    %s8 = scalar_lea.sflag [#allocation6], 1
    %9 = vsyncpa %s8, 0
    %10 = vsyncpa [#allocation9], 0
    %s11 = scalar_lea.sflag [#allocation9], 1
    %12 = vsyncpa %s11, 0
    %13 = vsyncpa [#allocation7], 0
    loop: start=0, step=1, limit=10
    $region2: #{tpu_custom_call.1} parent=1 // loop_pre_header
      _
    $region3: #{tpu_custom_call.1} parent=1 // loop_header
      %s15 = sphi 0, %s19
      %p16 = scmp.ge.s32.totalorder %s15, 10
      %s22 = sphi 0, %s41
      %s23 = sphi 0, %s37
      %s24 = sphi 0, %s33
      %s25 = sphi 0, %s22
      %s26 = sphi 0, %s23
      %s27 = sphi 0, %s24
      %s28 = sphi 0, %s25
      %s29 = sphi 0, %s26
      %s30 = sphi 0, %s27
      %s48 = sphi 0, %s50
      %s51 = sphi 0, %s48
      %s52 = sphi 0, %s51
      %s68 = sphi 0, %s52
      %s78 = sphi 0, %s80
      %s81 = sphi 0, %s78
      %s82 = sphi 0, %s81
      %s98 = sphi 0, %s82
      %s102 = sphi 0, %s102
      %s104 = sphi 0, %s102
      %s105 = sphi 0, %s104
      %s119 = sphi 0, %s105
    $region4: #{tpu_custom_call.1} parent=1 // loop_header_branch
      %18 = sbr.rel (%p16) target = $region8
    $region5: #{tpu_custom_call.1} parent=1 // loop_body
      %s20 = ssub.s32 %s15, 1
      %s21 = ssub.s32 %s15, 2
      %s31 = sadd.s32 1, %s24
      %p32 = scmp.ge.s32.totalorder %s31, 1
      %s33 = scalar_select %p32, 0, %s31
      %s34 = sadd.s32 1, %s23
      %s35 = scalar_select %p32, %s34, %s23
      %p36 = scmp.ge.s32.totalorder %s35, 2
      %s37 = scalar_select %p36, 0, %s35
      %s38 = sadd.s32 1, %s22
      %s39 = scalar_select %p36, %s38, %s22
      %p40 = scmp.ge.s32.totalorder %s39, 4
      %s41 = scalar_select %p40, 0, %s39
      %s42 = ssub.s32 %s23, %s37
      %s43 = ssub.s32 %s22, %s41
      %s44 = sor.u32 %s42, %s43
      %s45 = ssub.s32 %s24, %s33
      %s46 = sor.u32 %s44, %s45
      %p47 = scmp.eq.s32.totalorder %s46, 0
      %s49 = sadd.s32 %s48, 1
      %s50 = scalar_select %p47, %s48, %s49
      %p53 = pneg %p47
      %p54 = scmp.eq.s32.totalorder %s15, 7
      %p55 = por %p53, %p54
      %p56 = scmp.ne.s32.totalorder %s48, %s51
      %p57 = scmp.eq.s32.totalorder %s15, 0
      %p58 = por %p56, %p57
      %p59 = scmp.ne.s32.totalorder %s48, %s51
      %p60 = scmp.eq.s32.totalorder %s20, 7
      %p61 = por %p59, %p60
      %p62 = scmp.ne.s32.totalorder %s51, %s52
      %p63 = scmp.eq.s32.totalorder %s20, 0
      %p64 = por %p62, %p63
      %p65 = scmp.ne.s32.totalorder %s51, %s52
      %p66 = scmp.eq.s32.totalorder %s21, 7
      %p67 = por %p65, %p66
      %p69 = scmp.ne.s32.totalorder %s52, %s68
      %p70 = scmp.eq.s32.totalorder %s21, 0
      %p71 = por %p69, %p70
      %s72 = ssub.s32 %s23, %s37
      %s73 = ssub.s32 %s22, %s41
      %s74 = sor.u32 %s72, %s73
      %s75 = ssub.s32 %s24, %s33
      %s76 = sor.u32 %s74, %s75
      %p77 = scmp.eq.s32.totalorder %s76, 0
      %s79 = sadd.s32 %s78, 1
      %s80 = scalar_select %p77, %s78, %s79
      %p83 = pneg %p77
      %p84 = scmp.eq.s32.totalorder %s15, 7
      %p85 = por %p83, %p84
      %p86 = scmp.ne.s32.totalorder %s78, %s81
      %p87 = scmp.eq.s32.totalorder %s15, 0
      %p88 = por %p86, %p87
      %p89 = scmp.ne.s32.totalorder %s78, %s81
      %p90 = scmp.eq.s32.totalorder %s20, 7
      %p91 = por %p89, %p90
      %p92 = scmp.ne.s32.totalorder %s81, %s82
      %p93 = scmp.eq.s32.totalorder %s20, 0
      %p94 = por %p92, %p93
      %p95 = scmp.ne.s32.totalorder %s81, %s82
      %p96 = scmp.eq.s32.totalorder %s21, 7
      %p97 = por %p95, %p96
      %p99 = scmp.ne.s32.totalorder %s82, %s98
      %p100 = scmp.eq.s32.totalorder %s21, 0
      %p101 = por %p99, %p100
      %s103 = sadd.s32 %s102, 1
      %p106 = scmp.eq.s32.totalorder %s15, 7
      %p107 = scmp.ne.s32.totalorder %s102, %s104
      %p108 = scmp.eq.s32.totalorder %s15, 0
      %p109 = por %p107, %p108
      %p110 = scmp.ne.s32.totalorder %s102, %s104
      %p111 = scmp.eq.s32.totalorder %s20, 7
      %p112 = por %p110, %p111
      %p113 = scmp.ne.s32.totalorder %s104, %s105
      %p114 = scmp.eq.s32.totalorder %s20, 0
      %p115 = por %p113, %p114
      %p116 = scmp.ne.s32.totalorder %s104, %s105
      %p117 = scmp.eq.s32.totalorder %s21, 7
      %p118 = por %p116, %p117
      %p120 = scmp.ne.s32.totalorder %s105, %s119
      %p121 = scmp.eq.s32.totalorder %s21, 0
      %p122 = por %p120, %p121
      %p123 = scmp.le.s32.totalorder 1, %s15
      %p124 = scmp.lt.s32.totalorder %s15, 9
      %p125 = pnand %p123, %p124
      %p126 = pneg %p125
      // Predicated region
      $region9: #{tpu_custom_call.1} parent=5 // pred_check
        _
      $region10: #{tpu_custom_call.1} parent=5 // pred_check_branch
        %128 = sbr.rel (%p125) target = $region12
      $region11: #{tpu_custom_call.1} parent=5 // pred_region
        %s129 = ssub.s32 %s15, 1
      $region12: #{tpu_custom_call.1} parent=5 // pred_fallthru
        _
      %p130 = scmp.lt.s32.totalorder %s15, 8
      // Predicated region
      $region13: #{tpu_custom_call.1} parent=5 // pred_check
        %p131 = pneg %p130
      $region14: #{tpu_custom_call.1} parent=5 // pred_check_branch
        %133 = sbr.rel (%p131) target = $region16
      $region15: #{tpu_custom_call.1} parent=5 // pred_region
        // Predicated region
        $region17: #{tpu_custom_call.1} parent=15 // pred_check
          %p134 = pneg %p58
        $region18: #{tpu_custom_call.1} parent=15 // pred_check_branch
          %136 = sbr.rel (%p134) target = $region20
        $region19: #{tpu_custom_call.1} parent=15 // pred_region
          %s137 = sand.u32 %s48, 1
          %s138 = scalar_lea.sflag [#allocation6], %s137
          %s139 = sand.u32 %s48, 1
          %s140 = smul.addr %s139, 16
          %s141 = scalar_lea.vmem [#allocation5], %s140
          %s142 = smul.u32 2, %s24
          %s144 = ssub.s32 256, 256
          %145 = vsyncadd %s138, %s144
          %s146 = smul.addr %s22, 2
          %s147 = sadd.s32 %s142, %s146
          %s148 = smul.addr %s23, 8
          %s149 = sadd.s32 %s147, %s148
          %s150 = smul.addr %s149, 128
          %s151 = scalar_lea.hbm %s0, %s150
          %s152 = sshll.u32 %s141, 4
          %s153 = int_to_ptr.vmem [resolvable:$true] %s152
          %158 = dma.hbm_to_vmem [thread:$0]  %s151, 256, %s153, %s138, 128, 128, 8
        $region20: #{tpu_custom_call.1} parent=15 // pred_fallthru
          _
        // Predicated region
        $region21: #{tpu_custom_call.1} parent=15 // pred_check
          %p159 = pneg %p88
        $region22: #{tpu_custom_call.1} parent=15 // pred_check_branch
          %161 = sbr.rel (%p159) target = $region24
        $region23: #{tpu_custom_call.1} parent=15 // pred_region
          %s162 = sand.u32 %s78, 1
          %s163 = scalar_lea.sflag [#allocation9], %s162
          %s164 = sand.u32 %s78, 1
          %s165 = smul.addr %s164, 16
          %s166 = scalar_lea.vmem [#allocation8], %s165
          %s167 = smul.u32 2, %s24
          %s169 = ssub.s32 256, 256
          %170 = vsyncadd %s163, %s169
          %s171 = smul.addr %s22, 2
          %s172 = sadd.s32 %s167, %s171
          %s173 = smul.addr %s23, 8
          %s174 = sadd.s32 %s172, %s173
          %s175 = smul.addr %s174, 128
          %s176 = scalar_lea.hbm %s1, %s175
          %s177 = sshll.u32 %s166, 4
          %s178 = int_to_ptr.vmem [resolvable:$true] %s177
          %183 = dma.hbm_to_vmem [thread:$0]  %s176, 256, %s178, %s163, 128, 128, 8
        $region24: #{tpu_custom_call.1} parent=15 // pred_fallthru
          _
      $region16: #{tpu_custom_call.1} parent=5 // pred_fallthru
        _
      %p184 = scmp.le.s32.totalorder 1, %s15
      %p185 = scmp.lt.s32.totalorder %s15, 9
      %p186 = pnand %p184, %p185
      %p187 = pneg %p186
      // Predicated region
      $region25: #{tpu_custom_call.1} parent=5 // pred_check
        _
      $region26: #{tpu_custom_call.1} parent=5 // pred_check_branch
        %189 = sbr.rel (%p186) target = $region28
      $region27: #{tpu_custom_call.1} parent=5 // pred_region
        %s190 = ssub.s32 %s15, 1
        %s191 = sand.u32 %s51, 1
        %s192 = scalar_lea.sflag [#allocation6], %s191
        %s193 = sand.u32 %s51, 1
        %s194 = smul.addr %s193, 16
        %s195 = scalar_lea.vmem [#allocation5], %s194
        // Predicated region
        $region29: #{tpu_custom_call.1} parent=27 // pred_check
          %p196 = pneg %p64
        $region30: #{tpu_custom_call.1} parent=27 // pred_check_branch
          %198 = sbr.rel (%p196) target = $region32
        $region31: #{tpu_custom_call.1} parent=27 // pred_region
          %199 = dma.done %s192, 256
        $region32: #{tpu_custom_call.1} parent=27 // pred_fallthru
          _
        %s200 = sand.u32 %s81, 1
        %s201 = scalar_lea.sflag [#allocation9], %s200
        %s202 = sand.u32 %s81, 1
        %s203 = smul.addr %s202, 16
        %s204 = scalar_lea.vmem [#allocation8], %s203
        // Predicated region
        $region33: #{tpu_custom_call.1} parent=27 // pred_check
          %p205 = pneg %p94
        $region34: #{tpu_custom_call.1} parent=27 // pred_check_branch
          %207 = sbr.rel (%p205) target = $region36
        $region35: #{tpu_custom_call.1} parent=27 // pred_region
          %208 = dma.done %s201, 256
        $region36: #{tpu_custom_call.1} parent=27 // pred_fallthru
          _
        %s209 = sand.u32 %s51, 1
        %s210 = scalar_lea.sflag [#allocation6], %s209
        %s211 = sand.u32 %s51, 1
        %s212 = smul.addr %s211, 16
        %s213 = scalar_lea.vmem [#allocation5], %s212
        %p214 = pneg %p64
        %p215 = pneg %p61
        %s216 = sand.u32 %s81, 1
        %s217 = scalar_lea.sflag [#allocation9], %s216
        %s218 = sand.u32 %s81, 1
        %s219 = smul.addr %s218, 16
        %s220 = scalar_lea.vmem [#allocation8], %s219
        %p221 = pneg %p94
        %p222 = pneg %p91
        %p223 = pneg %p115
        %p224 = pneg %p112
        %s225 = smul.u32 2, %s27
        %s226 = smul.u32 2, %s27
        %p227 = scmp.eq.s32.totalorder %s26, 0
        %p228 = scmp.eq.s32.totalorder %s27, 0
        %p229 = pnand %p227, %p228
        %p230 = pneg %p229
        %p231 = scmp.eq.s32.totalorder %s26, 1
        %p232 = pnand %p231, %p228
        %p233 = pneg %p232
        %p234 = scmp.eq.s32.totalorder %s25, 0
        %p235 = pnand %p234, %p230
        %p236 = pneg %p235
        // Predicated region
        $region37: #{tpu_custom_call.1} parent=27 // pred_check
          _
        $region38: #{tpu_custom_call.1} parent=27 // pred_check_branch
          %238 = sbr.rel (%p235) target = $region40
        $region39: #{tpu_custom_call.1} parent=27 // pred_region
          %s239 = scalar_lea.smem [#allocation4], 0
          %240 = sst [smem:[%s239]] 0.0
        $region40: #{tpu_custom_call.1} parent=27 // pred_fallthru
          _
        // Predicated region
        $region41: #{tpu_custom_call.1} parent=27 // pred_check
          _
        $region42: #{tpu_custom_call.1} parent=27 // pred_check_branch
          %242 = sbr.rel (%p229) target = $region44
        $region43: #{tpu_custom_call.1} parent=27 // pred_region
          %vm243 = vcmask 130048
          %244 = vst.msk [vmem:[#allocation2] sm:$0xff] %vm243, 0.0
          %245 = vst.msk [vmem:[#allocation2 + $0x8] sm:$0xff] %vm243, 0.0
          %246 = vst.msk [vmem:[#allocation3] sm:$0xff] %vm243, 0.0
          %247 = vst.msk [vmem:[#allocation3 + $0x8] sm:$0xff] %vm243, 0.0
        $region44: #{tpu_custom_call.1} parent=27 // pred_fallthru
          _
        %v248 = vld [vmem:[%s195] sm:$0xff]
        %v249 = vld [vmem:[%s195 + $0x8] sm:$0xff]
        %v250 = vld [vmem:[%s204] sm:$0xff]
        %v251 = vld [vmem:[%s204 + $0x8] sm:$0xff]
        %v252 = vld [vmem:[#allocation2] sm:$0xff]
        %v253 = vld [vmem:[#allocation2 + $0x8] sm:$0xff]
        %v254 = vmul.f32 %v248, %v250
        %v255 = vmul.f32 %v249, %v251
        %v256 = vadd.f32 %v252, %v254
        %v257 = vadd.f32 %v253, %v255
        %vm258 = vcmask 130048
        %259 = vst.msk [vmem:[#allocation2] sm:$0xff] %vm258, %v256
        %260 = vst.msk [vmem:[#allocation2 + $0x8] sm:$0xff] %vm258, %v257
        %v261 = vld [vmem:[#allocation3] sm:$0xff]
        %v262 = vld [vmem:[#allocation3 + $0x8] sm:$0xff]
        %v263 = vadd.f32 %v248, %v250
        %v264 = vadd.f32 %v249, %v251
        %v265 = vadd.f32 %v261, %v263
        %v266 = vadd.f32 %v262, %v264
        %267 = vst.msk [vmem:[#allocation3] sm:$0xff] %vm258, %v265
        %268 = vst.msk [vmem:[#allocation3 + $0x8] sm:$0xff] %vm258, %v266
        // Predicated region
        $region45: #{tpu_custom_call.1} parent=27 // pred_check
          _
        $region46: #{tpu_custom_call.1} parent=27 // pred_check_branch
          %270 = sbr.rel (%p232) target = $region48
        $region47: #{tpu_custom_call.1} parent=27 // pred_region
          %v271 = vld [vmem:[#allocation2] sm:$0xff]
          %v272 = vld [vmem:[#allocation2 + $0x8] sm:$0xff]
          %v273 = vsel %vm258, %v271, 0.0
          %v274 = vsel %vm258, %v272, 0.0
          %v275 = vadd.f32 %v273, %v274
          %276 = vadd.xlane.f32.xlu0 %v275
          %v277 = vpop.xlane.xlu0 %276
          %v278 = vrot.slane %v277, 4
          %v279 = vadd.f32 %v277, %v278
          %v280 = vrot.slane %v279, 2
          %v281 = vadd.f32 %v279, %v280
          %v282 = vrot.slane %v281, 1
          %v283 = vadd.f32 %v281, %v282
          %s284 = vtos %v283
          %v285 = vld [vmem:[#allocation3] sm:$0xff]
          %v286 = vld [vmem:[#allocation3 + $0x8] sm:$0xff]
          %v287 = vsel %vm258, %v285, 0.0
          %v288 = vsel %vm258, %v286, 0.0
          %v289 = vadd.f32 %v287, %v288
          %290 = vadd.xlane.f32.xlu0 %v289
          %v291 = vpop.xlane.xlu0 %290
          %v292 = vrot.slane %v291, 4
          %v293 = vadd.f32 %v291, %v292
          %v294 = vrot.slane %v293, 2
          %v295 = vadd.f32 %v293, %v294
          %v296 = vrot.slane %v295, 1
          %v297 = vadd.f32 %v295, %v296
          %s298 = vtos %v297
          %s299 = sadd.f32 %s298, 1.0
          %s300 = sld [smem:[#allocation4]]
          %s301 = smul.f32 %s284, 2.0
          %s302 = sadd.f32 %s301, 1.0
          %v303 = vstv %s299
          %v304 = vrcp.pop %v303
          %s305 = vtos %v304
          %s306 = smul.f32 %s302, %s305
          %s307 = sadd.f32 %s300, %s306
          %s308 = scalar_lea.smem [#allocation4], 0
          %309 = sst [smem:[%s308]] %s307
        $region48: #{tpu_custom_call.1} parent=27 // pred_fallthru
          _
        %p310 = scmp.eq.s32.totalorder %s25, 3
        %p311 = pnand %p310, %p233
        %p312 = pneg %p311
        // Predicated region
        $region49: #{tpu_custom_call.1} parent=27 // pred_check
          _
        $region50: #{tpu_custom_call.1} parent=27 // pred_check_branch
          %314 = sbr.rel (%p311) target = $region52
        $region51: #{tpu_custom_call.1} parent=27 // pred_region
          %s315 = sld [smem:[#allocation4]]
          %s316 = smul.f32 %s315, 0.25
          %s317 = ssub.f32 1.0, %s316
          %s318 = scalar_lea.smem [#allocation10], 0
          %319 = sst [smem:[%s318]] %s317
        $region52: #{tpu_custom_call.1} parent=27 // pred_fallthru
          _
        // Predicated region
        $region53: #{tpu_custom_call.1} parent=27 // pred_check
          %p320 = pneg %p112
        $region54: #{tpu_custom_call.1} parent=27 // pred_check_branch
          %322 = sbr.rel (%p320) target = $region56
        $region55: #{tpu_custom_call.1} parent=27 // pred_region
          %s324 = ssub.s32 16, 16
          %325 = vsyncadd [#allocation7], %s324
          %328 = dma.smem_to_hbm [#allocation10], 16, %s2, [#allocation7]
        $region56: #{tpu_custom_call.1} parent=27 // pred_fallthru
          _
        // Predicated region
        $region57: #{tpu_custom_call.1} parent=27 // pred_check
          %p329 = pneg %p112
        $region58: #{tpu_custom_call.1} parent=27 // pred_check_branch
          %331 = sbr.rel (%p329) target = $region60
        $region59: #{tpu_custom_call.1} parent=27 // pred_region
          %332 = dma.done [#allocation7], 16
        $region60: #{tpu_custom_call.1} parent=27 // pred_fallthru
          _
        %333 = sfence
      $region28: #{tpu_custom_call.1} parent=5 // pred_fallthru
        _
      %p334 = scmp.le.s32.totalorder 2, %s15
      // Predicated region
      $region61: #{tpu_custom_call.1} parent=5 // pred_check
        %p335 = pneg %p334
      $region62: #{tpu_custom_call.1} parent=5 // pred_check_branch
        %337 = sbr.rel (%p335) target = $region64
      $region63: #{tpu_custom_call.1} parent=5 // pred_region
        %s338 = ssub.s32 %s15, 2
      $region64: #{tpu_custom_call.1} parent=5 // pred_fallthru
        _
    $region6: #{tpu_custom_call.1} parent=1 // loop_footer
      %s19 = sadd.s32 1, %s15
    $region7: #{tpu_custom_call.1} parent=1 // loop_footer_branch
      %14 = sbr.rel target = $region3
    $region8: #{tpu_custom_call.1} parent=1 // loop_exit
      _
    %339 = vsyncpa [#allocation6], 1
    %s340 = scalar_lea.sflag [#allocation6], 1
    %341 = vsyncpa %s340, 1
    %342 = vsyncpa [#allocation9], 1
    %s343 = scalar_lea.sflag [#allocation9], 1
    %344 = vsyncpa %s343, 1
    %345 = vsyncpa [#allocation7], 1
    %s346 = scalar_lea.sflag [#allocation7], 1
    %347 = vsyncpa %s346, 1

</llo_original>
